<compile_context>
chip_gen: v7x
topology: tpu7x:2x2x1
jax: 0.10.0
libtpu: 0.0.40
codegen_flags: <defaults>
</compile_context>

<pallas_src>
import functools

import jax
import jax.numpy as jnp
from jax import lax
from jax.experimental import pallas as pl
from jax.experimental.pallas import tpu as pltpu

_BN_EPS = 1e-5


def _conv_bn_relu_mp_kernel(x_ref, w_ref, g_ref, beta_ref, o_ref, z_scr, *,
                            pooling: int, mxu_dtype):
    # x_ref:    (N, L, C_in)        channels-last activations (VMEM-resident)
    # w_ref:    (K*C_in, C_blk)     im2col conv weight tile, row = k*C_in + c
    #                               (already cast to mxu_dtype in the wrapper)
    # g_ref:    (1, C_blk)          BN gamma tile
    # beta_ref: (1, C_blk)          BN beta tile
    # o_ref:    (N, L_pool, C_blk)
    # z_scr:    (L_out, C_blk) f32  scratch for the strided-read max-pool
    N, L, C_in = x_ref.shape
    KC, C_blk = w_ref.shape
    K = KC // C_in
    L_out = L - K + 1
    L_pool = L_out // pooling

    w_mx = w_ref[...]                                    # weight-stationary tile

    # ---- Pass 1: Conv1d.  Per batch row: im2col via K lane-axis shifted
    #      views of a 2-D slice, then ONE 2-D MXU matmul (bf16 in, f32 acc).
    #      Conv bias omitted: exact no-op under training-mode BatchNorm.
    ys = []
    ch_sum = jnp.zeros((1, C_blk), jnp.float32)
    for n in range(N):
        xn = x_ref[n]                                     # (L, C_in)
        xcol = jnp.concatenate([xn[k:k + L_out, :] for k in range(K)],
                               axis=-1).astype(mxu_dtype)  # (L_out, K*C_in)
        yn = jnp.dot(xcol, w_mx,
                     preferred_element_type=jnp.float32)   # (L_out, C_blk) f32
        ys.append(yn)
        ch_sum = ch_sum + jnp.sum(yn, axis=0, keepdims=True)

    # ---- BatchNorm1d (training-mode batch stats over (N, L_out)).
    #      Two-pass centered variance for numerical robustness (bf16 feed).
    inv_cnt = 1.0 / (N * L_out)
    mean = ch_sum * inv_cnt                               # (1, C_blk)
    ch_sq = jnp.zeros((1, C_blk), jnp.float32)
    for n in range(N):
        cd = ys[n] - mean
        ch_sq = ch_sq + jnp.sum(cd * cd, axis=0, keepdims=True)
    var = ch_sq * inv_cnt                                 # biased variance
    scale = g_ref[...] * lax.rsqrt(var + _BN_EPS)         # (1, C_blk)
    shift = beta_ref[...] - mean * scale

    # ---- Pass 2: fused scale/shift + ReLU + MaxPool1d(pooling).
    #      Pool = `pooling` strided reads from VMEM scratch, max-reduced.
    for n in range(N):
        zn = jnp.maximum(ys[n] * scale + shift, 0.0)      # (L_out, C_blk)
        if pooling == 1:
            o_ref[n] = zn.astype(o_ref.dtype)             # MaxPool1d(1) = identity
        else:
            z_scr[...] = zn
            pooled = z_scr[pl.ds(0, L_pool, stride=pooling), :]
            for off in range(1, pooling):
                pooled = jnp.maximum(
                    pooled, z_scr[pl.ds(off, L_pool, stride=pooling), :])
            o_ref[n] = pooled.astype(o_ref.dtype)


def conv1d_block_nlc(x_nlc, weight, gamma, beta, *, pooling=1,
                     cout_block=None, mxu_dtype=jnp.bfloat16):
    """Channels-last fused Conv_1d block.

    x_nlc: (N, L, C_in) activations (keep NLC across stacked layers; transpose
    only at model boundaries).  weight: (C_out, C_in, K); gamma/beta: (C_out,).
    """
    N, L, C_in = x_nlc.shape
    C_out, _, K = weight.shape
    L_out = L - K + 1
    L_pool = L_out // pooling
    assert L_out >= 1 and L_pool >= 1 and pooling >= 1

    # C_out lane-block: 256 (v6e/v7x MXU width) when divisible, else 128,
    # else the full (small) C_out.
    if cout_block is None:
        cout_block = 256 if C_out % 256 == 0 else (128 if C_out % 128 == 0 else C_out)
    assert C_out % cout_block == 0
    n_blocks = C_out // cout_block

    # ---- layout plumbing (wrapper-side, outside the kernel) ----
    w2 = jnp.transpose(weight, (2, 1, 0)).reshape(K * C_in, C_out)  # row = k*C_in + c
    w2 = w2.astype(mxu_dtype)                       # halves the weight DMA bytes
    g2 = gamma.reshape(1, C_out).astype(jnp.float32)
    b2 = beta.reshape(1, C_out).astype(jnp.float32)

    kernel = functools.partial(_conv_bn_relu_mp_kernel, pooling=pooling,
                               mxu_dtype=mxu_dtype)
    grid_spec = pltpu.PrefetchScalarGridSpec(
        num_scalar_prefetch=0,
        grid=(n_blocks,),
        in_specs=[
            # x: same block every grid step -> stays VMEM-resident.
            pl.BlockSpec((N, L, C_in), lambda j: (0, 0, 0)),
            pl.BlockSpec((K * C_in, cout_block), lambda j: (0, j)),
            pl.BlockSpec((1, cout_block), lambda j: (0, j)),
            pl.BlockSpec((1, cout_block), lambda j: (0, j)),
        ],
        out_specs=pl.BlockSpec((N, L_pool, cout_block), lambda j: (0, 0, j)),
        scratch_shapes=[pltpu.VMEM((L_out, cout_block), jnp.float32)],
    )
    return pl.pallas_call(
        kernel,
        out_shape=jax.ShapeDtypeStruct((N, L_pool, C_out), x_nlc.dtype),
        grid_spec=grid_spec,
        compiler_params=pltpu.CompilerParams(
            # Per-channel BN stats => C_out blocks are independent; "parallel"
            # shards them across v7x's two TensorCores.
            dimension_semantics=("parallel",),
            vmem_limit_bytes=64 * 1024 * 1024,
        ),
    )(x_nlc, w2, g2, b2)


def conv1d_block(x, weight, bias, gamma, beta, *, pooling=1, cout_block=None,
                 mxu_dtype=jnp.bfloat16):
    """PyTorch-layout wrapper.  x: (N, C_in, L); returns (N, C_out, L_pool).

    `bias` is accepted for nn.Conv1d API parity but unused: a per-channel
    constant added before training-mode BatchNorm cancels exactly.
    """
    del bias  # exact algebraic elimination under batch-statistics BN
    x_nlc = jnp.transpose(x, (0, 2, 1))                 # NCL -> NLC (boundary only)
    out_nlc = conv1d_block_nlc(x_nlc, weight, gamma, beta, pooling=pooling,
                               cout_block=cout_block, mxu_dtype=mxu_dtype)
    return jnp.transpose(out_nlc, (0, 2, 1))            # NLC -> NCL


def _reference(x, weight, bias, gamma, beta, *, pooling=1,
               mxu_dtype=jnp.float32):
    """Pure-JAX reference with PyTorch semantics (training-mode BN), INCLUDING
    the conv bias (proves the in-kernel bias elimination is exact).  With
    mxu_dtype=bf16 it mirrors the kernel's MXU feed for a tight comparison."""
    y = lax.conv_general_dilated(
        x.astype(mxu_dtype), weight.astype(mxu_dtype),
        window_strides=(1,), padding="VALID",
        dimension_numbers=("NCH", "OIH", "NCH"),
        preferred_element_type=jnp.float32)
    y = y + bias[None, :, None].astype(jnp.float32)
    mean = jnp.mean(y, axis=(0, 2), keepdims=True)
    var = jnp.mean((y - mean) ** 2, axis=(0, 2), keepdims=True)
    y = (y - mean) / jnp.sqrt(var + _BN_EPS)
    y = y * gamma[None, :, None] + beta[None, :, None]
    y = jnp.maximum(y, 0.0)
    N, C, Lc = y.shape
    Lp = Lc // pooling
    return y[:, :, :Lp * pooling].reshape(N, C, Lp, pooling).max(axis=-1)


if __name__ == "__main__":
    key = jax.random.PRNGKey(0)
    N, C_in, L, K = 2, 4, 16, 3

    # (C_out, explicit C_out block, pooling):
    #   * first config exercises the C_out grid (2 lane-blocks of 128) and the
    #     strided max-pool path;
    #   * second exercises the small-C_out full-block path with pooling=1
    #     (the real Musicnn backend layers use pooling=1).
    configs = [(256, 128, 3), (8, None, 1)]

    for C_out, cblk, pooling in configs:
        kx, kw, kb, kg, kbt = jax.random.split(jax.random.fold_in(key, C_out), 5)
        x = jax.random.normal(kx, (N, C_in, L), dtype=jnp.float32)
        weight = 0.1 * jax.random.normal(kw, (C_out, C_in, K), dtype=jnp.float32)
        bias = 0.1 * jax.random.normal(kb, (C_out,), dtype=jnp.float32)
        gamma = 1.0 + 0.1 * jax.random.normal(kg, (C_out,), dtype=jnp.float32)
        beta = 0.1 * jax.random.normal(kbt, (C_out,), dtype=jnp.float32)

        out = conv1d_block(x, weight, bias, gamma, beta,
                           pooling=pooling, cout_block=cblk)
        out = jax.block_until_ready(out)

        L_pool = (L - K + 1) // pooling
        assert out.shape == (N, C_out, L_pool), out.shape

        # Tight check vs a reference that mirrors the kernel's bf16 MXU feed.
        ref_bf16 = _reference(x, weight, bias, gamma, beta,
                              pooling=pooling, mxu_dtype=jnp.bfloat16)
        assert jnp.allclose(out, ref_bf16, atol=5e-3, rtol=5e-3), \
            "mismatch vs bf16-feed reference"

        # Loose check vs full-f32 PyTorch-semantics reference (bounds the
        # bf16 MXU-feed approximation error).
        ref_f32 = _reference(x, weight, bias, gamma, beta,
                             pooling=pooling, mxu_dtype=jnp.float32)
        assert jnp.allclose(out, ref_f32, atol=1e-1, rtol=1e-1), \
            "mismatch vs f32 reference"

    print("KERNEL_OK")
</pallas_src>

<mosaic_0001>
module attributes {stable_mosaic.version = 11 : i64} {
  func.func @_conv_bn_relu_mp_kernel(%arg0: i32, %arg1: memref<2x16x4xf32, #tpu.memory_space<vmem>>, %arg2: memref<12x128xbf16, #tpu.memory_space<vmem>>, %arg3: memref<1x128xf32, #tpu.memory_space<vmem>>, %arg4: memref<1x128xf32, #tpu.memory_space<vmem>>, %arg5: memref<2x4x128xf32, #tpu.memory_space<vmem>>, %arg6: memref<14x128xf32, #tpu.memory_space<vmem>>) attributes {dimension_semantics = [#tpu.dimension_semantics<parallel>], iteration_bounds = array<i64: 2>, scalar_prefetch = 0 : i64, scratch_operands = 1 : i64, tpu.core_type = #tpu.core_type<tc>, window_params = [{pipeline_mode = #tpu.pipeline_mode<synchronous>, transform_indices = @transform_0, window_bounds = array<i64: 2, 16, 4>}, {transform_indices = @transform_1, window_bounds = array<i64: 12, 128>}, {transform_indices = @transform_2, window_bounds = array<i64: 1, 128>}, {transform_indices = @transform_3, window_bounds = array<i64: 1, 128>}, {transform_indices = @transform_4, window_bounds = array<i64: 2, 4, 128>}]} {
    %c0 = arith.constant 0 : index
    %c0_0 = arith.constant 0 : index
    %0 = vector.load %arg2[%c0, %c0_0] : memref<12x128xbf16, #tpu.memory_space<vmem>>, vector<12x128xbf16>
    %cst = arith.constant 0.000000e+00 : f32
    %1 = vector.broadcast %cst : f32 to vector<1x128xf32>
    %c0_1 = arith.constant 0 : index
    %c0_2 = arith.constant 0 : index
    %c0_3 = arith.constant 0 : index
    %2 = vector.load %arg1[%c0_1, %c0_2, %c0_3] : memref<2x16x4xf32, #tpu.memory_space<vmem>>, vector<1x16x4xf32>
    %3 = vector.shape_cast %2 : vector<1x16x4xf32> to vector<16x4xf32>
    %4 = vector.extract_strided_slice %3 {offsets = [0, 0], sizes = [14, 4], strides = [1, 1]} : vector<16x4xf32> to vector<14x4xf32>
    %5 = vector.extract_strided_slice %3 {offsets = [1, 0], sizes = [14, 4], strides = [1, 1]} : vector<16x4xf32> to vector<14x4xf32>
    %6 = vector.extract_strided_slice %3 {offsets = [2, 0], sizes = [14, 4], strides = [1, 1]} : vector<16x4xf32> to vector<14x4xf32>
    %7 = tpu.concatenate %4, %5, %6 in 1 : vector<14x4xf32>, vector<14x4xf32>, vector<14x4xf32> -> vector<14x12xf32>
    %8 = arith.truncf %7 : vector<14x12xf32> to vector<14x12xbf16>
    %cst_4 = arith.constant dense<0.000000e+00> : vector<14x128xf32>
    %9 = tpu.matmul %8, %0, %cst_4 {dimension_numbers = #tpu.dot_dimension_numbers<[1], [0], [0], [1], [0, 0, 1, 1], [], []>} : vector<14x12xbf16>, vector<12x128xbf16>, vector<14x128xf32> -> vector<14x128xf32>
    %cst_5 = arith.constant dense<0.000000e+00> : vector<128xf32>
    %10 = vector.multi_reduction <add>, %9, %cst_5 [0] : vector<14x128xf32> to vector<128xf32>
    %11 = vector.shape_cast %10 : vector<128xf32> to vector<1x128xf32>
    %12 = arith.addf %1, %11 : vector<1x128xf32>
    %c1 = arith.constant 1 : index
    %c0_6 = arith.constant 0 : index
    %c0_7 = arith.constant 0 : index
    %13 = vector.load %arg1[%c1, %c0_6, %c0_7] : memref<2x16x4xf32, #tpu.memory_space<vmem>>, vector<1x16x4xf32>
    %14 = vector.shape_cast %13 : vector<1x16x4xf32> to vector<16x4xf32>
    %15 = vector.extract_strided_slice %14 {offsets = [0, 0], sizes = [14, 4], strides = [1, 1]} : vector<16x4xf32> to vector<14x4xf32>
    %16 = vector.extract_strided_slice %14 {offsets = [1, 0], sizes = [14, 4], strides = [1, 1]} : vector<16x4xf32> to vector<14x4xf32>
    %17 = vector.extract_strided_slice %14 {offsets = [2, 0], sizes = [14, 4], strides = [1, 1]} : vector<16x4xf32> to vector<14x4xf32>
    %18 = tpu.concatenate %15, %16, %17 in 1 : vector<14x4xf32>, vector<14x4xf32>, vector<14x4xf32> -> vector<14x12xf32>
    %19 = arith.truncf %18 : vector<14x12xf32> to vector<14x12xbf16>
    %cst_8 = arith.constant dense<0.000000e+00> : vector<14x128xf32>
    %20 = tpu.matmul %19, %0, %cst_8 {dimension_numbers = #tpu.dot_dimension_numbers<[1], [0], [0], [1], [0, 0, 1, 1], [], []>} : vector<14x12xbf16>, vector<12x128xbf16>, vector<14x128xf32> -> vector<14x128xf32>
    %cst_9 = arith.constant dense<0.000000e+00> : vector<128xf32>
    %21 = vector.multi_reduction <add>, %20, %cst_9 [0] : vector<14x128xf32> to vector<128xf32>
    %22 = vector.shape_cast %21 : vector<128xf32> to vector<1x128xf32>
    %23 = arith.addf %12, %22 : vector<1x128xf32>
    %cst_10 = arith.constant 0.0357142873 : f32
    %24 = vector.broadcast %cst_10 : f32 to vector<1x128xf32>
    %25 = arith.mulf %23, %24 : vector<1x128xf32>
    %cst_11 = arith.constant 0.000000e+00 : f32
    %26 = vector.broadcast %cst_11 : f32 to vector<1x128xf32>
    %27 = vector.broadcast %25 : vector<1x128xf32> to vector<14x128xf32>
    %28 = arith.subf %9, %27 : vector<14x128xf32>
    %29 = arith.mulf %28, %28 : vector<14x128xf32>
    %cst_12 = arith.constant dense<0.000000e+00> : vector<128xf32>
    %30 = vector.multi_reduction <add>, %29, %cst_12 [0] : vector<14x128xf32> to vector<128xf32>
    %31 = vector.shape_cast %30 : vector<128xf32> to vector<1x128xf32>
    %32 = arith.addf %26, %31 : vector<1x128xf32>
    %33 = vector.broadcast %25 : vector<1x128xf32> to vector<14x128xf32>
    %34 = arith.subf %20, %33 : vector<14x128xf32>
    %35 = arith.mulf %34, %34 : vector<14x128xf32>
    %cst_13 = arith.constant dense<0.000000e+00> : vector<128xf32>
    %36 = vector.multi_reduction <add>, %35, %cst_13 [0] : vector<14x128xf32> to vector<128xf32>
    %37 = vector.shape_cast %36 : vector<128xf32> to vector<1x128xf32>
    %38 = arith.addf %32, %37 : vector<1x128xf32>
    %cst_14 = arith.constant 0.0357142873 : f32
    %39 = vector.broadcast %cst_14 : f32 to vector<1x128xf32>
    %40 = arith.mulf %38, %39 : vector<1x128xf32>
    %c0_15 = arith.constant 0 : index
    %c0_16 = arith.constant 0 : index
    %41 = vector.load %arg3[%c0_15, %c0_16] : memref<1x128xf32, #tpu.memory_space<vmem>>, vector<1x128xf32>
    %cst_17 = arith.constant 9.99999974E-6 : f32
    %42 = vector.broadcast %cst_17 : f32 to vector<1x128xf32>
    %43 = arith.addf %40, %42 : vector<1x128xf32>
    %44 = math.rsqrt %43 : vector<1x128xf32>
    %45 = arith.mulf %41, %44 : vector<1x128xf32>
    %c0_18 = arith.constant 0 : index
    %c0_19 = arith.constant 0 : index
    %46 = vector.load %arg4[%c0_18, %c0_19] : memref<1x128xf32, #tpu.memory_space<vmem>>, vector<1x128xf32>
    %47 = arith.mulf %25, %45 : vector<1x128xf32>
    %48 = arith.subf %46, %47 : vector<1x128xf32>
    %49 = vector.broadcast %45 : vector<1x128xf32> to vector<14x128xf32>
    %50 = arith.mulf %9, %49 : vector<14x128xf32>
    %51 = vector.broadcast %48 : vector<1x128xf32> to vector<14x128xf32>
    %52 = arith.addf %50, %51 : vector<14x128xf32>
    %cst_20 = arith.constant 0.000000e+00 : f32
    %53 = vector.broadcast %cst_20 : f32 to vector<14x128xf32>
    %54 = arith.maximumf %52, %53 : vector<14x128xf32>
    %c0_21 = arith.constant 0 : index
    %c0_22 = arith.constant 0 : index
    %55 = vector.load %arg6[%c0_21, %c0_22] : memref<14x128xf32, #tpu.memory_space<vmem>>, vector<14x128xf32>
    tpu.vector_store %arg6[%c0_21, %c0_22], %54 {strides = array<i32>} : memref<14x128xf32, #tpu.memory_space<vmem>>, vector<14x128xf32>,
    %c0_23 = arith.constant 0 : index
    %c0_24 = arith.constant 0 : index
    %56 = tpu.strided_load %arg6[%c0_23, %c0_24] {strides = array<i32: 3, 1>} : memref<14x128xf32, #tpu.memory_space<vmem>>, vector<4x128xf32>
    %c1_25 = arith.constant 1 : index
    %c0_26 = arith.constant 0 : index
    %57 = tpu.strided_load %arg6[%c1_25, %c0_26] {strides = array<i32: 3, 1>} : memref<14x128xf32, #tpu.memory_space<vmem>>, vector<4x128xf32>
    %58 = arith.maximumf %56, %57 : vector<4x128xf32>
    %c2 = arith.constant 2 : index
    %c0_27 = arith.constant 0 : index
    %59 = tpu.strided_load %arg6[%c2, %c0_27] {strides = array<i32: 3, 1>} : memref<14x128xf32, #tpu.memory_space<vmem>>, vector<4x128xf32>
    %60 = arith.maximumf %58, %59 : vector<4x128xf32>
    %c0_28 = arith.constant 0 : index
    %c0_29 = arith.constant 0 : index
    %c0_30 = arith.constant 0 : index
    %61 = vector.load %arg5[%c0_28, %c0_29, %c0_30] : memref<2x4x128xf32, #tpu.memory_space<vmem>>, vector<1x4x128xf32>
    %62 = vector.shape_cast %61 : vector<1x4x128xf32> to vector<4x128xf32>
    %63 = vector.shape_cast %60 : vector<4x128xf32> to vector<1x4x128xf32>
    tpu.vector_store %arg5[%c0_28, %c0_29, %c0_30], %63 {strides = array<i32>} : memref<2x4x128xf32, #tpu.memory_space<vmem>>, vector<1x4x128xf32>,
    %64 = vector.broadcast %45 : vector<1x128xf32> to vector<14x128xf32>
    %65 = arith.mulf %20, %64 : vector<14x128xf32>
    %66 = vector.broadcast %48 : vector<1x128xf32> to vector<14x128xf32>
    %67 = arith.addf %65, %66 : vector<14x128xf32>
    %cst_31 = arith.constant 0.000000e+00 : f32
    %68 = vector.broadcast %cst_31 : f32 to vector<14x128xf32>
    %69 = arith.maximumf %67, %68 : vector<14x128xf32>
    %c0_32 = arith.constant 0 : index
    %c0_33 = arith.constant 0 : index
    %70 = vector.load %arg6[%c0_32, %c0_33] : memref<14x128xf32, #tpu.memory_space<vmem>>, vector<14x128xf32>
    tpu.vector_store %arg6[%c0_32, %c0_33], %69 {strides = array<i32>} : memref<14x128xf32, #tpu.memory_space<vmem>>, vector<14x128xf32>,
    %c0_34 = arith.constant 0 : index
    %c0_35 = arith.constant 0 : index
    %71 = tpu.strided_load %arg6[%c0_34, %c0_35] {strides = array<i32: 3, 1>} : memref<14x128xf32, #tpu.memory_space<vmem>>, vector<4x128xf32>
    %c1_36 = arith.constant 1 : index
    %c0_37 = arith.constant 0 : index
    %72 = tpu.strided_load %arg6[%c1_36, %c0_37] {strides = array<i32: 3, 1>} : memref<14x128xf32, #tpu.memory_space<vmem>>, vector<4x128xf32>
    %73 = arith.maximumf %71, %72 : vector<4x128xf32>
    %c2_38 = arith.constant 2 : index
    %c0_39 = arith.constant 0 : index
    %74 = tpu.strided_load %arg6[%c2_38, %c0_39] {strides = array<i32: 3, 1>} : memref<14x128xf32, #tpu.memory_space<vmem>>, vector<4x128xf32>
    %75 = arith.maximumf %73, %74 : vector<4x128xf32>
    %c1_40 = arith.constant 1 : index
    %c0_41 = arith.constant 0 : index
    %c0_42 = arith.constant 0 : index
    %76 = vector.load %arg5[%c1_40, %c0_41, %c0_42] : memref<2x4x128xf32, #tpu.memory_space<vmem>>, vector<1x4x128xf32>
    %77 = vector.shape_cast %76 : vector<1x4x128xf32> to vector<4x128xf32>
    %78 = vector.shape_cast %75 : vector<4x128xf32> to vector<1x4x128xf32>
    tpu.vector_store %arg5[%c1_40, %c0_41, %c0_42], %78 {strides = array<i32>} : memref<2x4x128xf32, #tpu.memory_space<vmem>>, vector<1x4x128xf32>,
    return
  }
  func.func @transform_0(%arg0: i32) -> (i32, i32, i32) {
    %c0_i32 = arith.constant 0 : i32
    %c0_i32_0 = arith.constant 0 : i32
    %c0_i32_1 = arith.constant 0 : i32
    %c0_i32_2 = arith.constant 0 : i32
    return %c0_i32, %c0_i32_0, %c0_i32_1 : i32, i32, i32
  }
  func.func @transform_1(%arg0: i32) -> (i32, i32) {
    %c0_i32 = arith.constant 0 : i32
    %c0_i32_0 = arith.constant 0 : i32
    return %c0_i32, %arg0 : i32, i32
  }
  func.func @transform_2(%arg0: i32) -> (i32, i32) {
    %c0_i32 = arith.constant 0 : i32
    %c0_i32_0 = arith.constant 0 : i32
    return %c0_i32, %arg0 : i32, i32
  }
  func.func @transform_3(%arg0: i32) -> (i32, i32) {
    %c0_i32 = arith.constant 0 : i32
    %c0_i32_0 = arith.constant 0 : i32
    return %c0_i32, %arg0 : i32, i32
  }
  func.func @transform_4(%arg0: i32) -> (i32, i32, i32) {
    %c0_i32 = arith.constant 0 : i32
    %c0_i32_0 = arith.constant 0 : i32
    %c0_i32_1 = arith.constant 0 : i32
    return %c0_i32, %c0_i32_0, %arg0 : i32, i32, i32
  }
}

</mosaic_0001>

<llo_original>
// kernel: tpu_custom_call.1
$region0: #{tpu_custom_call.1}
  #allocation0 [shape = 'u32[]', space=smem, size = 0x4, offset = 0x4, fixed_abs, tag = 'smem constant byte address 0x4 - core index']
  #allocation1 [shape = 'u32[144,128]{1,0:T(1,128)}', space=vmem, size = 0x12000, scoped, tag = 'internal scratch']
  #allocation2 [shape = 'f32[14,128]{1,0:T(8,128)}', space=vmem, size = 0x2000, scoped, tag = 'scratch operand']
  %s0 = inlined_call_operand.hbm [shape: f32[2,16,4], index: 0, kind: input, shape index: {}]
  %s1 = inlined_call_operand.hbm [shape: bf16[12,256], index: 1, kind: input, shape index: {}]
  %s2 = inlined_call_operand.hbm [shape: f32[1,256], index: 2, kind: input, shape index: {}]
  %s3 = inlined_call_operand.hbm [shape: f32[1,256], index: 3, kind: input, shape index: {}]
  %s4 = inlined_call_operand.hbm [shape: f32[2,4,256], index: 4, kind: output, shape index: {}]
  %s5 = sld [smem:[#allocation0]]
  $region65: #{tpu_custom_call.1} parent=0
    _
  %s7 = ssub.s32 1, %s5
  %s8 = scalar_select 0, %s7, %s5
  $region1: #{tpu_custom_call.1} parent=0
    #allocation3 [shape = 'u8[16384]{0}', space=vmem, size = 0x4000, scoped, tag = 'input window, operand 0, single buffered']
    #allocation4 [shape = 's32[2]{0}', space=sflag, size = 0x8, scoped, tag = 'scoped memory for tpu_custom_call.1']
    #allocation5 [shape = 's32[2]{0}', space=sflag, size = 0x8, scoped, tag = 'scoped memory for tpu_custom_call.1']
    #allocation6 [shape = 'u8[8192]{0}', space=vmem, size = 0x2000, scoped, tag = 'input window, operand 1']
    #allocation7 [shape = 's32[2]{0}', space=sflag, size = 0x8, scoped, tag = 'scoped memory for tpu_custom_call.1']
    #allocation8 [shape = 'u8[1024]{0}', space=vmem, size = 0x400, scoped, tag = 'input window, operand 2']
    #allocation9 [shape = 'u8[1024]{0}', space=vmem, size = 0x400, scoped, tag = 'input window, operand 3']
    #allocation10 [shape = 's32[2]{0}', space=sflag, size = 0x8, scoped, tag = 'scoped memory for tpu_custom_call.1']
    #allocation11 [shape = 'u8[8192]{0}', space=vmem, size = 0x2000, scoped, tag = 'output window, operand 0']
    %9 = vsyncpa [#allocation4], 0
    %10 = vsyncpa [#allocation7], 0
    %s11 = scalar_lea.sflag [#allocation7], 1
    %12 = vsyncpa %s11, 0
    %13 = vsyncpa [#allocation10], 0
    %s14 = scalar_lea.sflag [#allocation10], 1
    %15 = vsyncpa %s14, 0
    %16 = vsyncpa [#allocation5], 0
    %s17 = scalar_lea.sflag [#allocation5], 1
    %18 = vsyncpa %s17, 0
    loop: start=0, step=1, limit=4
    $region2: #{tpu_custom_call.1} parent=1 // loop_pre_header
      _
    $region3: #{tpu_custom_call.1} parent=1 // loop_header
      %s20 = sphi 0, %s24
      %p21 = scmp.ge.s32.totalorder %s20, 4
      %s28 = sphi 0, %s28
      %s30 = sphi 0, %s28
      %s31 = sphi 0, %s30
      %s45 = sphi 0, %s31
      %s51 = sphi 0, %s53
      %s54 = sphi 0, %s51
      %s55 = sphi 0, %s54
      %s71 = sphi 0, %s55
      %s77 = sphi 0, %s79
      %s80 = sphi 0, %s77
      %s81 = sphi 0, %s80
      %s97 = sphi 0, %s81
      %s103 = sphi 0, %s105
      %s106 = sphi 0, %s103
      %s107 = sphi 0, %s106
      %s123 = sphi 0, %s107
      %s129 = sphi 0, %s131
      %s132 = sphi 0, %s129
      %s133 = sphi 0, %s132
      %s149 = sphi 0, %s133
    $region4: #{tpu_custom_call.1} parent=1 // loop_header_branch
      %23 = sbr.rel (%p21) target = $region8
    $region5: #{tpu_custom_call.1} parent=1 // loop_body
      %s25 = ssub.s32 %s20, 1
      %s26 = ssub.s32 %s20, 2
      %s27 = sadd.s32 %s20, 1
      %s29 = sadd.s32 %s28, 1
      %p32 = scmp.eq.s32.totalorder %s20, 1
      %p33 = scmp.ne.s32.totalorder %s28, %s30
      %p34 = scmp.eq.s32.totalorder %s20, 0
      %p35 = por %p33, %p34
      %p36 = scmp.ne.s32.totalorder %s28, %s30
      %p37 = scmp.eq.s32.totalorder %s25, 1
      %p38 = por %p36, %p37
      %p39 = scmp.ne.s32.totalorder %s30, %s31
      %p40 = scmp.eq.s32.totalorder %s25, 0
      %p41 = por %p39, %p40
      %p42 = scmp.ne.s32.totalorder %s30, %s31
      %p43 = scmp.eq.s32.totalorder %s26, 1
      %p44 = por %p42, %p43
      %p46 = scmp.ne.s32.totalorder %s31, %s45
      %p47 = scmp.eq.s32.totalorder %s26, 0
      %p48 = por %p46, %p47
      %s49 = ssub.s32 %s20, %s27
      %p50 = scmp.eq.s32.totalorder %s49, 0
      %s52 = sadd.s32 %s51, 1
      %s53 = scalar_select %p50, %s51, %s52
      %p56 = pneg %p50
      %p57 = scmp.eq.s32.totalorder %s20, 1
      %p58 = por %p56, %p57
      %p59 = scmp.ne.s32.totalorder %s51, %s54
      %p60 = scmp.eq.s32.totalorder %s20, 0
      %p61 = por %p59, %p60
      %p62 = scmp.ne.s32.totalorder %s51, %s54
      %p63 = scmp.eq.s32.totalorder %s25, 1
      %p64 = por %p62, %p63
      %p65 = scmp.ne.s32.totalorder %s54, %s55
      %p66 = scmp.eq.s32.totalorder %s25, 0
      %p67 = por %p65, %p66
      %p68 = scmp.ne.s32.totalorder %s54, %s55
      %p69 = scmp.eq.s32.totalorder %s26, 1
      %p70 = por %p68, %p69
      %p72 = scmp.ne.s32.totalorder %s55, %s71
      %p73 = scmp.eq.s32.totalorder %s26, 0
      %p74 = por %p72, %p73
      %s75 = ssub.s32 %s20, %s27
      %p76 = scmp.eq.s32.totalorder %s75, 0
      %s78 = sadd.s32 %s77, 1
      %s79 = scalar_select %p76, %s77, %s78
      %p82 = pneg %p76
      %p83 = scmp.eq.s32.totalorder %s20, 1
      %p84 = por %p82, %p83
      %p85 = scmp.ne.s32.totalorder %s77, %s80
      %p86 = scmp.eq.s32.totalorder %s20, 0
      %p87 = por %p85, %p86
      %p88 = scmp.ne.s32.totalorder %s77, %s80
      %p89 = scmp.eq.s32.totalorder %s25, 1
      %p90 = por %p88, %p89
      %p91 = scmp.ne.s32.totalorder %s80, %s81
      %p92 = scmp.eq.s32.totalorder %s25, 0
      %p93 = por %p91, %p92
      %p94 = scmp.ne.s32.totalorder %s80, %s81
      %p95 = scmp.eq.s32.totalorder %s26, 1
      %p96 = por %p94, %p95
      %p98 = scmp.ne.s32.totalorder %s81, %s97
      %p99 = scmp.eq.s32.totalorder %s26, 0
      %p100 = por %p98, %p99
      %s101 = ssub.s32 %s20, %s27
      %p102 = scmp.eq.s32.totalorder %s101, 0
      %s104 = sadd.s32 %s103, 1
      %s105 = scalar_select %p102, %s103, %s104
      %p108 = pneg %p102
      %p109 = scmp.eq.s32.totalorder %s20, 1
      %p110 = por %p108, %p109
      %p111 = scmp.ne.s32.totalorder %s103, %s106
      %p112 = scmp.eq.s32.totalorder %s20, 0
      %p113 = por %p111, %p112
      %p114 = scmp.ne.s32.totalorder %s103, %s106
      %p115 = scmp.eq.s32.totalorder %s25, 1
      %p116 = por %p114, %p115
      %p117 = scmp.ne.s32.totalorder %s106, %s107
      %p118 = scmp.eq.s32.totalorder %s25, 0
      %p119 = por %p117, %p118
      %p120 = scmp.ne.s32.totalorder %s106, %s107
      %p121 = scmp.eq.s32.totalorder %s26, 1
      %p122 = por %p120, %p121
      %p124 = scmp.ne.s32.totalorder %s107, %s123
      %p125 = scmp.eq.s32.totalorder %s26, 0
      %p126 = por %p124, %p125
      %s127 = ssub.s32 %s20, %s27
      %p128 = scmp.eq.s32.totalorder %s127, 0
      %s130 = sadd.s32 %s129, 1
      %s131 = scalar_select %p128, %s129, %s130
      %p134 = pneg %p128
      %p135 = scmp.eq.s32.totalorder %s20, 1
      %p136 = por %p134, %p135
      %p137 = scmp.ne.s32.totalorder %s129, %s132
      %p138 = scmp.eq.s32.totalorder %s20, 0
      %p139 = por %p137, %p138
      %p140 = scmp.ne.s32.totalorder %s129, %s132
      %p141 = scmp.eq.s32.totalorder %s25, 1
      %p142 = por %p140, %p141
      %p143 = scmp.ne.s32.totalorder %s132, %s133
      %p144 = scmp.eq.s32.totalorder %s25, 0
      %p145 = por %p143, %p144
      %p146 = scmp.ne.s32.totalorder %s132, %s133
      %p147 = scmp.eq.s32.totalorder %s26, 1
      %p148 = por %p146, %p147
      %p150 = scmp.ne.s32.totalorder %s133, %s149
      %p151 = scmp.eq.s32.totalorder %s26, 0
      %p152 = por %p150, %p151
      %p153 = scmp.le.s32.totalorder 1, %s20
      %p154 = scmp.lt.s32.totalorder %s20, 3
      %p155 = pnand %p153, %p154
      %p156 = pneg %p155
      // Predicated region
      $region9: #{tpu_custom_call.1} parent=5 // pred_check
        _
      $region10: #{tpu_custom_call.1} parent=5 // pred_check_branch
        %158 = sbr.rel (%p155) target = $region12
      $region11: #{tpu_custom_call.1} parent=5 // pred_region
        %s159 = ssub.s32 %s20, 1
        // Predicated region
        $region13: #{tpu_custom_call.1} parent=11 // pred_check
          %p160 = pneg %p41
        $region14: #{tpu_custom_call.1} parent=11 // pred_check_branch
          %162 = sbr.rel (%p160) target = $region16
        $region15: #{tpu_custom_call.1} parent=11 // pred_region
          %s164 = ssub.s32 512, 512
          %165 = vsyncadd [#allocation4], %s164
          %s166 = sshll.u32 [#allocation3], 4
          %s167 = int_to_ptr.vmem [resolvable:$true] %s166
          %172 = dma.hbm_to_vmem [thread:$0]  %s0, 512, %s167, [#allocation4], 128, 128, 8
        $region16: #{tpu_custom_call.1} parent=11 // pred_fallthru
          _
      $region12: #{tpu_custom_call.1} parent=5 // pred_fallthru
        _
      %p173 = scmp.lt.s32.totalorder %s20, 2
      // Predicated region
      $region17: #{tpu_custom_call.1} parent=5 // pred_check
        %p174 = pneg %p173
      $region18: #{tpu_custom_call.1} parent=5 // pred_check_branch
        %176 = sbr.rel (%p174) target = $region20
      $region19: #{tpu_custom_call.1} parent=5 // pred_region
        // Predicated region
        $region21: #{tpu_custom_call.1} parent=19 // pred_check
          %p177 = pneg %p61
        $region22: #{tpu_custom_call.1} parent=19 // pred_check_branch
          %179 = sbr.rel (%p177) target = $region24
        $region23: #{tpu_custom_call.1} parent=19 // pred_region
          %s180 = sand.u32 %s20, 1
          %s181 = scalar_lea.sflag [#allocation7], %s180
          %s182 = sand.u32 %s51, 1
          %s183 = smul.addr %s182, 8
          %s184 = scalar_lea.vmem [#allocation6], %s183
          %s186 = ssub.s32 128, 128
          %187 = vsyncadd %s181, %s186
          %s188 = smul.addr %s20, 64
          %s189 = scalar_lea.hbm %s1, %s188
          %s190 = sshll.u32 %s184, 4
          %s191 = int_to_ptr.vmem [resolvable:$true] %s190
          %196 = dma.hbm_to_vmem [thread:$0]  %s189, 128, %s191, %s181, 128, 64, 4
        $region24: #{tpu_custom_call.1} parent=19 // pred_fallthru
          _
        // Predicated region
        $region25: #{tpu_custom_call.1} parent=19 // pred_check
          %p197 = pneg %p87
        $region26: #{tpu_custom_call.1} parent=19 // pred_check_branch
          %199 = sbr.rel (%p197) target = $region28
        $region27: #{tpu_custom_call.1} parent=19 // pred_region
          %s200 = sand.u32 %s20, 1
          %s201 = scalar_lea.sflag [#allocation7], %s200
          %s202 = sand.u32 %s77, 1
          %s203 = scalar_lea.vmem [#allocation8], %s202
          %s205 = ssub.s32 16, 16
          %206 = vsyncadd %s201, %s205
          %s207 = smul.addr %s20, 16
          %s208 = scalar_lea.hbm %s2, %s207
          %s210 = sshll.u32 %s203, 4
          %s211 = int_to_ptr.vmem [resolvable:$true] %s210
          %213 = dma.hbm_to_vmem [thread:$0]  %s208, 16, %s211, %s201
        $region28: #{tpu_custom_call.1} parent=19 // pred_fallthru
          _
        // Predicated region
        $region29: #{tpu_custom_call.1} parent=19 // pred_check
          %p214 = pneg %p113
        $region30: #{tpu_custom_call.1} parent=19 // pred_check_branch
          %216 = sbr.rel (%p214) target = $region32
        $region31: #{tpu_custom_call.1} parent=19 // pred_region
          %s217 = sand.u32 %s103, 1
          %s218 = scalar_lea.sflag [#allocation10], %s217
          %s219 = sand.u32 %s103, 1
          %s220 = scalar_lea.vmem [#allocation9], %s219
          %s222 = ssub.s32 16, 16
          %223 = vsyncadd %s218, %s222
          %s224 = smul.addr %s20, 16
          %s225 = scalar_lea.hbm %s3, %s224
          %s227 = sshll.u32 %s220, 4
          %s228 = int_to_ptr.vmem [resolvable:$true] %s227
          %230 = dma.hbm_to_vmem [thread:$0]  %s225, 16, %s228, %s218
        $region32: #{tpu_custom_call.1} parent=19 // pred_fallthru
          _
      $region20: #{tpu_custom_call.1} parent=5 // pred_fallthru
        _
      %p231 = scmp.le.s32.totalorder 1, %s20
      %p232 = scmp.lt.s32.totalorder %s20, 3
      %p233 = pnand %p231, %p232
      %p234 = pneg %p233
      // Predicated region
      $region33: #{tpu_custom_call.1} parent=5 // pred_check
        _
      $region34: #{tpu_custom_call.1} parent=5 // pred_check_branch
        %236 = sbr.rel (%p233) target = $region36
      $region35: #{tpu_custom_call.1} parent=5 // pred_region
        %s237 = ssub.s32 %s20, 1
        // Predicated region
        $region37: #{tpu_custom_call.1} parent=35 // pred_check
          %p238 = pneg %p41
        $region38: #{tpu_custom_call.1} parent=35 // pred_check_branch
          %240 = sbr.rel (%p238) target = $region40
        $region39: #{tpu_custom_call.1} parent=35 // pred_region
          %241 = dma.done [#allocation4], 512
        $region40: #{tpu_custom_call.1} parent=35 // pred_fallthru
          _
        %s242 = sand.u32 %s25, 1
        %s243 = scalar_lea.sflag [#allocation7], %s242
        %s244 = sand.u32 %s54, 1
        %s245 = smul.addr %s244, 8
        %s246 = scalar_lea.vmem [#allocation6], %s245
        // Predicated region
        $region41: #{tpu_custom_call.1} parent=35 // pred_check
          %p247 = pneg %p67
        $region42: #{tpu_custom_call.1} parent=35 // pred_check_branch
          %249 = sbr.rel (%p247) target = $region44
        $region43: #{tpu_custom_call.1} parent=35 // pred_region
          %250 = dma.done %s243, 128
        $region44: #{tpu_custom_call.1} parent=35 // pred_fallthru
          _
        %s251 = sand.u32 %s25, 1
        %s252 = scalar_lea.sflag [#allocation7], %s251
        %s253 = sand.u32 %s80, 1
        %s254 = scalar_lea.vmem [#allocation8], %s253
        // Predicated region
        $region45: #{tpu_custom_call.1} parent=35 // pred_check
          %p255 = pneg %p93
        $region46: #{tpu_custom_call.1} parent=35 // pred_check_branch
          %257 = sbr.rel (%p255) target = $region48
        $region47: #{tpu_custom_call.1} parent=35 // pred_region
          %258 = dma.done %s252, 16
        $region48: #{tpu_custom_call.1} parent=35 // pred_fallthru
          _
        %s259 = sand.u32 %s106, 1
        %s260 = scalar_lea.sflag [#allocation10], %s259
        %s261 = sand.u32 %s106, 1
        %s262 = scalar_lea.vmem [#allocation9], %s261
        // Predicated region
        $region49: #{tpu_custom_call.1} parent=35 // pred_check
          %p263 = pneg %p119
        $region50: #{tpu_custom_call.1} parent=35 // pred_check_branch
          %265 = sbr.rel (%p263) target = $region52
        $region51: #{tpu_custom_call.1} parent=35 // pred_region
          %266 = dma.done %s260, 16
        $region52: #{tpu_custom_call.1} parent=35 // pred_fallthru
          _
        %p267 = pneg %p41
        %p268 = pneg %p38
        %s269 = sand.u32 %s25, 1
        %s270 = scalar_lea.sflag [#allocation7], %s269
        %s271 = sand.u32 %s54, 1
        %s272 = smul.addr %s271, 8
        %s273 = scalar_lea.vmem [#allocation6], %s272
        %p274 = pneg %p67
        %p275 = pneg %p64
        %s276 = sand.u32 %s25, 1
        %s277 = scalar_lea.sflag [#allocation7], %s276
        %s278 = sand.u32 %s80, 1
        %s279 = scalar_lea.vmem [#allocation8], %s278
        %p280 = pneg %p93
        %p281 = pneg %p90
        %s282 = sand.u32 %s106, 1
        %s283 = scalar_lea.sflag [#allocation10], %s282
        %s284 = sand.u32 %s106, 1
        %s285 = scalar_lea.vmem [#allocation9], %s284
        %p286 = pneg %p119
        %p287 = pneg %p116
        %p288 = pneg %p145
        %p289 = pneg %p142
        %s290 = sand.u32 %s132, 1
        %s291 = scalar_lea.sflag [#allocation5], %s290
        %s292 = sand.u32 %s132, 1
        %s293 = smul.addr %s292, 8
        %s294 = scalar_lea.vmem [#allocation11], %s293
        %v296 = vld [vmem:[%s246] sm:$0xf]
        %v297 = vld [vmem:[%s246 + $0x4] sm:$0x3]
        %v298 = vld [vmem:[#allocation3] sm:$0xff]
        %v299 = vld [vmem:[#allocation3 + $0x8] sm:$0xff]
        %vm302 = vcmask 1046528
        %v303 = vrot.slane %v298, 1
        %v304 = vrot.slane %v299, 1
        %v305 = vsel %vm302, %v303, %v304
        %306 = vrot.lane.b32.xlu0 %v305, 4
        %v307 = vpop.permute.xlu0 %306
        %308 = vrot.lane.b32.xlu0 %v304, 4
        %v309 = vpop.permute.xlu0 %308
        %vm312 = vcmask 1045504
        %v313 = vrot.slane %v298, 2
        %v314 = vrot.slane %v299, 2
        %v315 = vsel %vm312, %v313, %v314
        %316 = vrot.lane.b32.xlu0 %v315, 8
        %v317 = vpop.permute.xlu0 %316
        %318 = vrot.lane.b32.xlu0 %v314, 8
        %v319 = vpop.permute.xlu0 %318
        %vm322 = vcmask 31744
        %v323 = vsel %vm322, %v298, %v307
        %v324 = vsel %vm322, %v299, %v309
        %vm325 = vcmask 64512
        %v326 = vsel %vm325, %v323, %v317
        %v327 = vsel %vm325, %v324, %v319
        %v328 = vpack.c.bf16 %v327, %v326
        %v331 = vunpack.c.l.b16 %v296
        %v332 = vunpack.c.l.b16 %v297
        %v333 = vpack.c.b16 %v332, %v331
        %vm334 = vcmask 97280
        %v336 = vsel %vm334, %v328, 0
        %v339 = vsel %vm312, %v333, 0
        %341 = vmatprep.subr.bf16.mxu0 0
        %342 = vmatpush1.bf16.msra.mxu0 %v339
        %343 = vmatprep.subr.bf16.mxu0 0
        %344 = vmatpush1.bf16.msra.mxu0 0
        %345 = vmatprep.subr.bf16.mxu0 0
        %346 = vmatpush1.bf16.msra.mxu0 0
        %347 = vmatprep.subr.bf16.mxu0 0
        %348 = vmatpush1.bf16.msra.mxu0 0
        %349 = vmatprep.subr.bf16.mxu0 0
        %350 = vmatpush1.bf16.msra.mxu0 0
        %351 = vmatprep.subr.bf16.mxu0 0
        %352 = vmatpush1.bf16.msra.mxu0 0
        %353 = vmatprep.subr.bf16.mxu0 0
        %354 = vmatpush1.bf16.msra.mxu0 0
        %355 = vmatprep.subr.bf16.mxu0 0
        %356 = vmatpush1.bf16.msra.mxu0 0
        %357 = vmatprep.subr.bf16.mxu0 0
        %358 = vmatpush1.bf16.msra.mxu0 0
        %359 = vmatprep.subr.bf16.mxu0 0
        %360 = vmatpush1.bf16.msra.mxu0 0
        %361 = vmatprep.subr.bf16.mxu0 0
        %362 = vmatpush1.bf16.msra.mxu0 0
        %363 = vmatprep.subr.bf16.mxu0 0
        %364 = vmatpush1.bf16.msra.mxu0 0
        %365 = vmatprep.subr.bf16.mxu0 0
        %366 = vmatpush1.bf16.msra.mxu0 0
        %367 = vmatprep.subr.bf16.mxu0 0
        %368 = vmatpush1.bf16.msra.mxu0 0
        %369 = vmatprep.subr.bf16.mxu0 0
        %370 = vmatpush1.bf16.msra.mxu0 0
        %371 = vmatprep.subr.bf16.mxu0 0
        %372 = vmatpush1.bf16.msra.mxu0 0
        %373 = vmatprep.mubr.bf16.mxu0 0
        %374 = vmatmul.mubr.bf16.gmra.mrb[0].mxu0 %v336
        %v375 = vpop.f32.mrb[0].mxu0
        %v376 = vadd.f32 0.0, %v375
        %v377 = vpop.f32.mrb[0].mxu0
        %v378 = vpop.f32.mrb[0].mxu0
        %v379 = vadd.f32 0.0, %v378
        %v380 = vpop.f32.mrb[0].mxu0
        %381 = vdwg.mxu0
        %v382 = vsel %vm312, %v379, 0.0
        %v383 = vadd.f32 %v376, %v382
        %v384 = vrot.slane %v383, 4
        %v385 = vadd.f32 %v383, %v384
        %v386 = vrot.slane %v385, 2
        %v387 = vadd.f32 %v385, %v386
        %v388 = vrot.slane %v387, 1
        %v389 = vadd.f32 %v387, %v388
        %v390 = vadd.f32 %v389, 0.0
        %s391 = scalar_lea.vmem [#allocation3], 16
        %v392 = vld [vmem:[%s391] sm:$0xff]
        %v393 = vld [vmem:[%s391 + $0x8] sm:$0xff]
        %v396 = vrot.slane %v392, 1
        %v397 = vrot.slane %v393, 1
        %v398 = vsel %vm302, %v396, %v397
        %399 = vrot.lane.b32.xlu0 %v398, 4
        %v400 = vpop.permute.xlu0 %399
        %401 = vrot.lane.b32.xlu0 %v397, 4
        %v402 = vpop.permute.xlu0 %401
        %v405 = vrot.slane %v392, 2
        %v406 = vrot.slane %v393, 2
        %v407 = vsel %vm312, %v405, %v406
        %408 = vrot.lane.b32.xlu0 %v407, 8
        %v409 = vpop.permute.xlu0 %408
        %410 = vrot.lane.b32.xlu0 %v406, 8
        %v411 = vpop.permute.xlu0 %410
        %v414 = vsel %vm322, %v392, %v400
        %v415 = vsel %vm322, %v393, %v402
        %v416 = vsel %vm325, %v414, %v409
        %v417 = vsel %vm325, %v415, %v411
        %v418 = vpack.c.bf16 %v417, %v416
        %v420 = vsel %vm334, %v418, 0
        %422 = vmatprep.subr.bf16.mxu0 0
        %423 = vmatpush1.bf16.msra.mxu0 %v339
        %424 = vmatprep.subr.bf16.mxu0 0
        %425 = vmatpush1.bf16.msra.mxu0 0
        %426 = vmatprep.subr.bf16.mxu0 0
        %427 = vmatpush1.bf16.msra.mxu0 0
        %428 = vmatprep.subr.bf16.mxu0 0
        %429 = vmatpush1.bf16.msra.mxu0 0
        %430 = vmatprep.subr.bf16.mxu0 0
        %431 = vmatpush1.bf16.msra.mxu0 0
        %432 = vmatprep.subr.bf16.mxu0 0
        %433 = vmatpush1.bf16.msra.mxu0 0
        %434 = vmatprep.subr.bf16.mxu0 0
        %435 = vmatpush1.bf16.msra.mxu0 0
        %436 = vmatprep.subr.bf16.mxu0 0
        %437 = vmatpush1.bf16.msra.mxu0 0
        %438 = vmatprep.subr.bf16.mxu0 0
        %439 = vmatpush1.bf16.msra.mxu0 0
        %440 = vmatprep.subr.bf16.mxu0 0
        %441 = vmatpush1.bf16.msra.mxu0 0
        %442 = vmatprep.subr.bf16.mxu0 0
        %443 = vmatpush1.bf16.msra.mxu0 0
        %444 = vmatprep.subr.bf16.mxu0 0
        %445 = vmatpush1.bf16.msra.mxu0 0
        %446 = vmatprep.subr.bf16.mxu0 0
        %447 = vmatpush1.bf16.msra.mxu0 0
        %448 = vmatprep.subr.bf16.mxu0 0
        %449 = vmatpush1.bf16.msra.mxu0 0
        %450 = vmatprep.subr.bf16.mxu0 0
        %451 = vmatpush1.bf16.msra.mxu0 0
        %452 = vmatprep.subr.bf16.mxu0 0
        %453 = vmatpush1.bf16.msra.mxu0 0
        %454 = vmatprep.mubr.bf16.mxu0 0
        %455 = vmatmul.mubr.bf16.gmra.mrb[0].mxu0 %v420
        %v456 = vpop.f32.mrb[0].mxu0
        %v457 = vadd.f32 0.0, %v456
        %v458 = vpop.f32.mrb[0].mxu0
        %v459 = vpop.f32.mrb[0].mxu0
        %v460 = vadd.f32 0.0, %v459
        %v461 = vpop.f32.mrb[0].mxu0
        %462 = vdwg.mxu0
        %v463 = vsel %vm312, %v460, 0.0
        %v464 = vadd.f32 %v457, %v463
        %v465 = vrot.slane %v464, 4
        %v466 = vadd.f32 %v464, %v465
        %v467 = vrot.slane %v466, 2
        %v468 = vadd.f32 %v466, %v467
        %v469 = vrot.slane %v468, 1
        %v470 = vadd.f32 %v468, %v469
        %v471 = vadd.f32 %v390, %v470
        %v472 = vmul.f32 %v471, 0.035714287
        %v473 = vsub.f32 %v376, %v472
        %v474 = vsub.f32 %v379, %v472
        %v475 = vmul.f32 %v473, %v473
        %v476 = vmul.f32 %v474, %v474
        %v477 = vsel %vm312, %v476, 0.0
        %v478 = vadd.f32 %v475, %v477
        %v479 = vrot.slane %v478, 4
        %v480 = vadd.f32 %v478, %v479
        %v481 = vrot.slane %v480, 2
        %v482 = vadd.f32 %v480, %v481
        %v483 = vrot.slane %v482, 1
        %v484 = vadd.f32 %v482, %v483
        %v485 = vadd.f32 %v484, 0.0
        %v486 = vsub.f32 %v457, %v472
        %v487 = vsub.f32 %v460, %v472
        %v488 = vmul.f32 %v486, %v486
        %v489 = vmul.f32 %v487, %v487
        %v490 = vsel %vm312, %v489, 0.0
        %v491 = vadd.f32 %v488, %v490
        %v492 = vrot.slane %v491, 4
        %v493 = vadd.f32 %v491, %v492
        %v494 = vrot.slane %v493, 2
        %v495 = vadd.f32 %v493, %v494
        %v496 = vrot.slane %v495, 1
        %v497 = vadd.f32 %v495, %v496
        %v498 = vadd.f32 %v485, %v497
        %v499 = vmul.f32 %v498, 0.035714287
        %v500 = vld [vmem:[%s254] sm:$0x1]
        %v501 = vadd.f32 %v499, 1e-05
        %v502 = vrsqrt.pop %v501
        %v503 = vmul.f32 %v500, %v502
        %v504 = vld [vmem:[%s262] sm:$0x1]
        %v505 = vmul.f32 %v472, %v503
        %v506 = vsub.f32 %v504, %v505
        %v508 = vlaneseq
        %v509 = vshrl.u32 %v508, 7
        %v510 = vsub.s32 0, %v509
        %v511 = vrot.slane %v503, %v510
        %v513 = vmul.f32 %v376, %v511
        %v514 = vmul.f32 %v379, %v511
        %v516 = vlaneseq
        %v517 = vshrl.u32 %v516, 7
        %v518 = vsub.s32 0, %v517
        %v519 = vrot.slane %v506, %v518
        %v521 = vadd.f32 %v513, %v519
        %v522 = vadd.f32 %v514, %v519
        %v523 = vmax.f32 %v521, 0.0
        %v524 = vmax.f32 %v522, 0.0
        %525 = vst [vmem:[#allocation2] sm:$0xff] %v523
        %526 = vst [vmem:[#allocation2 + $0x8] sm:$0x3f] %v524
        %v527 = vld [vmem:[#allocation2] ss:$3 sm:$0xf]
        %s528 = scalar_lea.vmem [#allocation2], 1
        %v529 = vld [vmem:[%s528] ss:$3 sm:$0xf]
        %v530 = vmax.f32 %v527, %v529
        %s531 = scalar_lea.vmem [#allocation2], 2
        %v532 = vld [vmem:[%s531] ss:$3 sm:$0xf]
        %v533 = vmax.f32 %v530, %v532
        %534 = vst [vmem:[%s294] sm:$0xf] %v533
        %v535 = vmul.f32 %v457, %v511
        %v536 = vmul.f32 %v460, %v511
        %v537 = vadd.f32 %v535, %v519
        %v538 = vadd.f32 %v536, %v519
        %v539 = vmax.f32 %v537, 0.0
        %v540 = vmax.f32 %v538, 0.0
        %541 = vst [vmem:[#allocation2] sm:$0xff] %v539
        %542 = vst [vmem:[#allocation2 + $0x8] sm:$0x3f] %v540
        %v543 = vld [vmem:[#allocation2] ss:$3 sm:$0xf]
        %v544 = vld [vmem:[%s528] ss:$3 sm:$0xf]
        %v545 = vmax.f32 %v543, %v544
        %v546 = vld [vmem:[%s531] ss:$3 sm:$0xf]
        %v547 = vmax.f32 %v545, %v546
        %s548 = scalar_lea.vmem %s294, 4 [#allocation11]
        %549 = vst [vmem:[%s548] sm:$0xf] %v547
        %s550 = sand.u32 %s132, 1
        %s551 = scalar_lea.sflag [#allocation5], %s550
        %s552 = sand.u32 %s132, 1
        %s553 = smul.addr %s552, 8
        %s554 = scalar_lea.vmem [#allocation11], %s553
        // Predicated region
        $region53: #{tpu_custom_call.1} parent=35 // pred_check
          %p555 = pneg %p142
        $region54: #{tpu_custom_call.1} parent=35 // pred_check_branch
          %557 = sbr.rel (%p555) target = $region56
        $region55: #{tpu_custom_call.1} parent=35 // pred_region
          %s559 = ssub.s32 128, 128
          %560 = vsyncadd %s551, %s559
          %s561 = smul.addr %s25, 64
          %s562 = scalar_lea.hbm %s4, %s561
          %s563 = sshll.u32 %s554, 4
          %s564 = int_to_ptr.vmem [resolvable:$true] %s563
          %569 = dma.vmem_to_hbm [thread:$0]  %s564, 128, %s562, %s551, 64, 128, 4
        $region56: #{tpu_custom_call.1} parent=35 // pred_fallthru
          _
      $region36: #{tpu_custom_call.1} parent=5 // pred_fallthru
        _
      %p570 = scmp.le.s32.totalorder 2, %s20
      // Predicated region
      $region57: #{tpu_custom_call.1} parent=5 // pred_check
        %p571 = pneg %p570
      $region58: #{tpu_custom_call.1} parent=5 // pred_check_branch
        %573 = sbr.rel (%p571) target = $region60
      $region59: #{tpu_custom_call.1} parent=5 // pred_region
        %s574 = ssub.s32 %s20, 2
        // Predicated region
        $region61: #{tpu_custom_call.1} parent=59 // pred_check
          %p575 = pneg %p148
        $region62: #{tpu_custom_call.1} parent=59 // pred_check_branch
          %577 = sbr.rel (%p575) target = $region64
        $region63: #{tpu_custom_call.1} parent=59 // pred_region
          %s578 = sand.u32 %s133, 1
          %s579 = scalar_lea.sflag [#allocation5], %s578
          %s580 = sand.u32 %s133, 1
          %s581 = smul.addr %s580, 8
          %s582 = scalar_lea.vmem [#allocation11], %s581
          %583 = dma.done %s579, 128
        $region64: #{tpu_custom_call.1} parent=59 // pred_fallthru
          _
      $region60: #{tpu_custom_call.1} parent=5 // pred_fallthru
        _
    $region6: #{tpu_custom_call.1} parent=1 // loop_footer
      %s24 = sadd.s32 1, %s20
    $region7: #{tpu_custom_call.1} parent=1 // loop_footer_branch
      %19 = sbr.rel target = $region3
    $region8: #{tpu_custom_call.1} parent=1 // loop_exit
      _
    %584 = vsyncpa [#allocation4], 1
    %s585 = scalar_lea.sflag [#allocation4], 1
    %586 = vsyncpa %s585, 1
    %587 = vsyncpa [#allocation7], 1
    %s588 = scalar_lea.sflag [#allocation7], 1
    %589 = vsyncpa %s588, 1
    %590 = vsyncpa [#allocation10], 1
    %s591 = scalar_lea.sflag [#allocation10], 1
    %592 = vsyncpa %s591, 1
    %593 = vsyncpa [#allocation5], 1
    %s594 = scalar_lea.sflag [#allocation5], 1
    %595 = vsyncpa %s594, 1

</llo_original>
